<compile_context>
chip_gen: v5e
topology: v5e:2x2
jax: 0.10.0
libtpu: 0.0.40
codegen_flags: <defaults>
</compile_context>

<pallas_src>
import functools
import math

import jax
import jax.numpy as jnp
from jax import lax
from jax.experimental import pallas as pl
from jax.experimental.pallas import tpu as pltpu


def _gcn_kernel(a_ref, x_ref, nl_ref, nr_ref, o_ref, *maybe_acc):
    """One (i, j, k) grid step of   out = D_in^-1/2 @ A @ D_out^-1/2 @ X.

    a_ref : (tm, tk) bf16 adjacency tile            A[dst_i, src_k]
    x_ref : (tk, tn) feature tile (input dtype)     X[src_k, feat_j]
    nl_ref: (Npad, 1) f32 source norms, VMEM-resident across the whole grid
    nr_ref: (Npad, 1) f32 destination norms, VMEM-resident across the grid
    o_ref : (tm, tn) output tile; doubles as the f32 accumulator when the
            output dtype is f32 (scratch only exists for low-precision out).
    """
    acc_ref = maybe_acc[0] if maybe_acc else o_ref
    tm, tk = a_ref.shape
    i = pl.program_id(0)
    k = pl.program_id(2)

    @pl.when(k == 0)
    def _():
        acc_ref[...] = jnp.zeros_like(acc_ref)

    # Per-source-node scale, precomputed in the wrapper, sliced out of the
    # resident (Npad, 1) vector -> no per-step DMA, no rsqrt recompute.
    k_start = pl.multiple_of(k * tk, tk)
    norm_l = nl_ref[pl.ds(k_start, tk), :]                       # (tk, 1) f32
    # Scale in f32 on the VPU; cast to bf16 only at the MXU boundary.
    x_scaled = (x_ref[...].astype(jnp.float32) * norm_l).astype(jnp.bfloat16)

    # copy_u + sum reduction == adjacency matmul; bf16 operands, f32 accumulate.
    acc_ref[...] += jnp.dot(a_ref[...], x_scaled,
                            preferred_element_type=jnp.float32)

    @pl.when(k == pl.num_programs(2) - 1)
    def _():
        # Per-destination-node scale, also from a resident vector.
        i_start = pl.multiple_of(i * tm, tm)
        norm_r = nr_ref[pl.ds(i_start, tm), :]                   # (tm, 1) f32
        o_ref[...] = (acc_ref[...] * norm_r).astype(o_ref.dtype)


def _round_up(x, m):
    return ((x + m - 1) // m) * m


@functools.partial(jax.jit, static_argnames=("tm", "tn", "tk"))
def graph_convolution(adj, feat, *, tm=256, tn=256, tk=512):
    """adj: (N, N) dense adjacency, adj[dst, src] in {0, 1}.  feat: (N, F)."""
    N = adj.shape[0]
    F = feat.shape[1]
    out_dtype = feat.dtype

    # ---- Graph-structure glue: degrees + norms (kept outside the kernel) ----
    # Both degree reductions and the bf16 cast of adj live in this one jit and
    # read the same array, so XLA fuses them into a single HBM pass over A.
    # Degrees / norms stay f32 regardless of feat dtype (bf16 cannot represent
    # integer degrees > 256 exactly).
    # TODO(synk): if graph metadata (cached in/out degrees) were available, the
    # O(N^2) degree reductions would be skipped entirely.
    adj_f32 = adj.astype(jnp.float32)
    deg_out = jnp.sum(adj_f32, axis=0)               # out-degree of source u
    deg_in = jnp.sum(adj_f32, axis=1)                # in-degree of destination v
    norm_l = lax.rsqrt(jnp.maximum(deg_out, 1.0)).reshape(N, 1)   # f32, O(N)
    norm_r = lax.rsqrt(jnp.maximum(deg_in, 1.0)).reshape(N, 1)

    # Adjacency values are 0/1 -> exact in bf16; halves its HBM traffic and
    # feeds the native bf16 MXU on v5e/v6e/v7x.
    adj_bf16 = adj.astype(jnp.bfloat16)

    # ---- Tile selection: clamp big defaults to the (128-aligned) problem,
    # then zero-pad so every grid axis divides exactly. ----
    tm = min(tm, _round_up(N, 128))
    tk = min(tk, _round_up(N, 128))
    tn = min(tn, _round_up(F, 128))
    n_pad = _round_up(N, math.lcm(tm, tk))
    f_pad = _round_up(F, tn)

    adj_p = jnp.pad(adj_bf16, ((0, n_pad - N), (0, n_pad - N)))
    feat_p = jnp.pad(feat, ((0, n_pad - N), (0, f_pad - F)))
    norm_l_p = jnp.pad(norm_l, ((0, n_pad - N), (0, 0)), constant_values=1.0)
    norm_r_p = jnp.pad(norm_r, ((0, n_pad - N), (0, 0)), constant_values=1.0)

    grid = (pl.cdiv(n_pad, tm), pl.cdiv(f_pad, tn), pl.cdiv(n_pad, tk))

    # f32 outputs accumulate directly in the resident output block; only
    # low-precision outputs need a separate f32 scratch accumulator.
    use_scratch = jnp.dtype(out_dtype) != jnp.dtype(jnp.float32)
    scratch_shapes = [pltpu.VMEM((tm, tn), jnp.float32)] if use_scratch else []

    # VMEM budget: double-buffered input/output tiles + resident norm vectors
    # (+ scratch).  Cap at v7x's 64 MiB physical VMEM per TensorCore; v5e's
    # 16 MiB default scoped limit is too small for 256/512-class tiles, so the
    # limit is set explicitly.
    out_itemsize = jnp.dtype(out_dtype).itemsize
    tile_bytes = (2 * tm * tk * 2                      # adjacency tiles (bf16)
                  + 2 * tk * tn * feat_p.dtype.itemsize
                  + 2 * tm * tn * out_itemsize
                  + 2 * 2 * n_pad * 4                  # resident norm vectors
                  + (tm * tn * 4 if use_scratch else 0))
    vmem_limit = int(min(max(2 * tile_bytes, 32 * 1024 * 1024),
                         64 * 1024 * 1024))

    out_p = pl.pallas_call(
        _gcn_kernel,
        out_shape=jax.ShapeDtypeStruct((n_pad, f_pad), out_dtype),
        grid_spec=pltpu.PrefetchScalarGridSpec(
            num_scalar_prefetch=0,
            grid=grid,
            in_specs=[
                pl.BlockSpec((tm, tk), lambda i, j, k: (i, k)),    # A tile
                pl.BlockSpec((tk, tn), lambda i, j, k: (k, j)),    # X tile
                pl.BlockSpec((n_pad, 1), lambda i, j, k: (0, 0)),  # norm_l (resident)
                pl.BlockSpec((n_pad, 1), lambda i, j, k: (0, 0)),  # norm_r (resident)
            ],
            out_specs=pl.BlockSpec((tm, tn), lambda i, j, k: (i, j)),
            scratch_shapes=scratch_shapes,
        ),
        compiler_params=pltpu.CompilerParams(
            # NOTE (v7x): for large problems keep the two parallel grid axes
            # at extent >= 2 so both TensorCores per chip get work.
            dimension_semantics=("parallel", "parallel", "arbitrary"),
            vmem_limit_bytes=vmem_limit,
        ),
    )(adj_p, feat_p, norm_l_p, norm_r_p)

    return out_p[:N, :F]


def _reference(adj, feat):
    """Pure-JAX reference matching the PyTorch/DGL forward (f32 math)."""
    deg_out = jnp.maximum(jnp.sum(adj, axis=0), 1.0)
    deg_in = jnp.maximum(jnp.sum(adj, axis=1), 1.0)
    h = feat * (deg_out ** -0.5)[:, None]
    rst = adj @ h
    return rst * (deg_in ** -0.5)[:, None]


if __name__ == "__main__":
    key = jax.random.PRNGKey(0)
    k_adj, k_feat = jax.random.split(key)

    N, F = 256, 128   # nodes, feature dim (small, demo-sized)

    # Deterministic random sparse-ish graph as a dense float adjacency.
    adj = jax.random.bernoulli(k_adj, p=0.1, shape=(N, N)).astype(jnp.float32)
    feat = jax.random.normal(k_feat, (N, F), dtype=jnp.float32)

    ref = _reference(adj, feat)

    # bf16 MXU operands (adjacency 0/1 exact, features lose ~8 mantissa bits)
    # with f32 accumulation -> relaxed tolerance vs the pure-f32 reference.
    tol = dict(atol=2e-2, rtol=2e-2)

    # 1) Default (large, clamped) tiles.
    out = jax.block_until_ready(graph_convolution(adj, feat))
    assert out.shape == (N, F) and out.dtype == feat.dtype
    assert jnp.allclose(out, ref, **tol), "mismatch vs reference (default tiles)"

    # 2) Small tiles: exercises the multi-step reduction axis and the dynamic
    #    pl.ds slicing of the resident norm vectors.
    out_small = jax.block_until_ready(
        graph_convolution(adj, feat, tm=128, tn=128, tk=128))
    assert jnp.allclose(out_small, ref, **tol), "mismatch vs reference (small tiles)"

    # 3) Non-tile-multiple N / F: exercises the pl.cdiv + zero-padding path.
    N2, F2 = 200, 96
    adj2 = adj[:N2, :N2]
    feat2 = feat[:N2, :F2]
    out2 = jax.block_until_ready(graph_convolution(adj2, feat2))
    ref2 = _reference(adj2, feat2)
    assert out2.shape == (N2, F2)
    assert jnp.allclose(out2, ref2, **tol), "mismatch vs reference (ragged shapes)"

    print("KERNEL_OK")
</pallas_src>

<mosaic_0001>
module attributes {stable_mosaic.version = 11 : i64} {
  func.func @_gcn_kernel(%arg0: i32, %arg1: i32, %arg2: i32, %arg3: memref<256x256xbf16, #tpu.memory_space<vmem>>, %arg4: memref<256x128xf32, #tpu.memory_space<vmem>>, %arg5: memref<256x1xf32, #tpu.memory_space<vmem>>, %arg6: memref<256x1xf32, #tpu.memory_space<vmem>>, %arg7: memref<256x128xf32, #tpu.memory_space<vmem>>) attributes {dimension_semantics = [#tpu.dimension_semantics<parallel>, #tpu.dimension_semantics<parallel>, #tpu.dimension_semantics<arbitrary>], iteration_bounds = array<i64: 1, 1, 1>, scalar_prefetch = 0 : i64, scratch_operands = 0 : i64, tpu.core_type = #tpu.core_type<tc>, window_params = [{transform_indices = @transform_0, window_bounds = array<i64: 256, 256>}, {transform_indices = @transform_1, window_bounds = array<i64: 256, 128>}, {pipeline_mode = #tpu.pipeline_mode<synchronous>, transform_indices = @transform_2, window_bounds = array<i64: 256, 1>}, {pipeline_mode = #tpu.pipeline_mode<synchronous>, transform_indices = @transform_3, window_bounds = array<i64: 256, 1>}, {transform_indices = @transform_4, window_bounds = array<i64: 256, 128>}]} {
    %c0_i32 = arith.constant 0 : i32
    %0 = arith.cmpi eq, %arg2, %c0_i32 : i32
    %1 = arith.extui %0 : i1 to i32
    %c0_i32_0 = arith.constant 0 : i32
    %2 = arith.cmpi ne, %1, %c0_i32_0 : i32
    scf.if %2 {
      %cst_11 = arith.constant 0.000000e+00 : f32
      %19 = vector.broadcast %cst_11 : f32 to vector<256x128xf32>
      %c0_12 = arith.constant 0 : index
      %c0_13 = arith.constant 0 : index
      %20 = vector.load %arg7[%c0_12, %c0_13] : memref<256x128xf32, #tpu.memory_space<vmem>>, vector<256x128xf32>
      tpu.vector_store %arg7[%c0_12, %c0_13], %19 {strides = array<i32>} : memref<256x128xf32, #tpu.memory_space<vmem>>, vector<256x128xf32>,
    } else {
    }
    %c256_i32 = arith.constant 256 : i32
    %3 = arith.muli %arg2, %c256_i32 : i32
    %4 = tpu.assume_multiple %3, 256 : i32
    %5 = arith.index_cast %4 : i32 to index
    %c0 = arith.constant 0 : index
    %6 = vector.load %arg5[%5, %c0] : memref<256x1xf32, #tpu.memory_space<vmem>>, vector<256x1xf32>
    %c0_1 = arith.constant 0 : index
    %c0_2 = arith.constant 0 : index
    %7 = vector.load %arg4[%c0_1, %c0_2] : memref<256x128xf32, #tpu.memory_space<vmem>>, vector<256x128xf32>
    %8 = vector.broadcast %6 : vector<256x1xf32> to vector<256x128xf32>
    %9 = arith.mulf %7, %8 : vector<256x128xf32>
    %10 = arith.truncf %9 : vector<256x128xf32> to vector<256x128xbf16>
    %c0_3 = arith.constant 0 : index
    %c0_4 = arith.constant 0 : index
    %11 = vector.load %arg7[%c0_3, %c0_4] : memref<256x128xf32, #tpu.memory_space<vmem>>, vector<256x128xf32>
    %c0_5 = arith.constant 0 : index
    %c0_6 = arith.constant 0 : index
    %12 = vector.load %arg3[%c0_5, %c0_6] : memref<256x256xbf16, #tpu.memory_space<vmem>>, vector<256x256xbf16>
    %cst = arith.constant dense<0.000000e+00> : vector<256x128xf32>
    %13 = tpu.matmul %12, %10, %cst {dimension_numbers = #tpu.dot_dimension_numbers<[1], [0], [0], [1], [0, 0, 1, 1], [], []>} : vector<256x256xbf16>, vector<256x128xbf16>, vector<256x128xf32> -> vector<256x128xf32>
    %14 = arith.addf %11, %13 : vector<256x128xf32>
    %c0_7 = arith.constant 0 : index
    %c0_8 = arith.constant 0 : index
    %15 = vector.load %arg7[%c0_7, %c0_8] : memref<256x128xf32, #tpu.memory_space<vmem>>, vector<256x128xf32>
    tpu.vector_store %arg7[%c0_7, %c0_8], %14 {strides = array<i32>} : memref<256x128xf32, #tpu.memory_space<vmem>>, vector<256x128xf32>,
    %c0_i32_9 = arith.constant 0 : i32
    %16 = arith.cmpi eq, %arg2, %c0_i32_9 : i32
    %17 = arith.extui %16 : i1 to i32
    %c0_i32_10 = arith.constant 0 : i32
    %18 = arith.cmpi ne, %17, %c0_i32_10 : i32
    scf.if %18 {
      %c256_i32_11 = arith.constant 256 : i32
      %19 = arith.muli %arg0, %c256_i32_11 : i32
      %20 = tpu.assume_multiple %19, 256 : i32
      %21 = arith.index_cast %20 : i32 to index
      %c0_12 = arith.constant 0 : index
      %22 = vector.load %arg6[%21, %c0_12] : memref<256x1xf32, #tpu.memory_space<vmem>>, vector<256x1xf32>
      %c0_13 = arith.constant 0 : index
      %c0_14 = arith.constant 0 : index
      %23 = vector.load %arg7[%c0_13, %c0_14] : memref<256x128xf32, #tpu.memory_space<vmem>>, vector<256x128xf32>
      %24 = vector.broadcast %22 : vector<256x1xf32> to vector<256x128xf32>
      %25 = arith.mulf %23, %24 : vector<256x128xf32>
      %c0_15 = arith.constant 0 : index
      %c0_16 = arith.constant 0 : index
      %26 = vector.load %arg7[%c0_15, %c0_16] : memref<256x128xf32, #tpu.memory_space<vmem>>, vector<256x128xf32>
      tpu.vector_store %arg7[%c0_15, %c0_16], %25 {strides = array<i32>} : memref<256x128xf32, #tpu.memory_space<vmem>>, vector<256x128xf32>,
    } else {
    }
    return
  }
  func.func @transform_0(%arg0: i32, %arg1: i32, %arg2: i32) -> (i32, i32) {
    %c0_i32 = arith.constant 0 : i32
    return %arg0, %arg2 : i32, i32
  }
  func.func @transform_1(%arg0: i32, %arg1: i32, %arg2: i32) -> (i32, i32) {
    %c0_i32 = arith.constant 0 : i32
    return %arg2, %arg1 : i32, i32
  }
  func.func @transform_2(%arg0: i32, %arg1: i32, %arg2: i32) -> (i32, i32) {
    %c0_i32 = arith.constant 0 : i32
    %c0_i32_0 = arith.constant 0 : i32
    %c0_i32_1 = arith.constant 0 : i32
    return %c0_i32, %c0_i32_0 : i32, i32
  }
  func.func @transform_3(%arg0: i32, %arg1: i32, %arg2: i32) -> (i32, i32) {
    %c0_i32 = arith.constant 0 : i32
    %c0_i32_0 = arith.constant 0 : i32
    %c0_i32_1 = arith.constant 0 : i32
    return %c0_i32, %c0_i32_0 : i32, i32
  }
  func.func @transform_4(%arg0: i32, %arg1: i32, %arg2: i32) -> (i32, i32) {
    %c0_i32 = arith.constant 0 : i32
    return %arg0, %arg1 : i32, i32
  }
}

</mosaic_0001>

<llo_original>
// kernel: graph_convolution.1
$region0: #{graph_convolution.1}
  #allocation0 [shape = 'u32[]', space=smem, size = 0x4, offset = 0x4, fixed_abs, tag = 'smem constant byte address 0x4 - core index']
  #allocation1 [shape = 'u32[72,128]{1,0:T(1,128)}', space=vmem, size = 0x9000, scoped, tag = 'internal scratch']
  %s0 = inlined_call_operand.vmem [shape: bf16[256,256], index: 0, kind: input, shape index: {}]
  %s1 = inlined_call_operand.vmem [shape: f32[256,128], index: 1, kind: input, shape index: {}]
  %s2 = inlined_call_operand.vmem [shape: f32[256,1], index: 2, kind: input, shape index: {}]
  %s3 = inlined_call_operand.vmem [shape: f32[256,1], index: 3, kind: input, shape index: {}]
  %s4 = inlined_call_operand.hbm [shape: f32[256,128], index: 4, kind: output, shape index: {}]
  %s5 = sld [smem:[#allocation0]]
  $region34: #{graph_convolution.1} parent=0
    _
  %s7 = ssub.s32 1, %s5
  %s8 = scalar_select 0, %s7, %s5
  $region1: #{graph_convolution.1} parent=0
    #allocation2 [shape = 'u8[131072]{0}', space=vmem, size = 0x20000, scoped, tag = 'output window, operand 0, single buffered']
    #allocation3 [shape = 's32[1]{0}', space=sflag, size = 0x4, scoped, tag = 'scoped memory for graph_convolution.1']
    %9 = vsyncpa [#allocation3], 0
    // Predicated region
    $region2: #{graph_convolution.1} parent=1 // pred_check
      _
    $region3: #{graph_convolution.1} parent=1 // pred_check_branch
      %11 = sbr.rel (0) target = $region5
    $region4: #{graph_convolution.1} parent=1 // pred_region
      _
    $region5: #{graph_convolution.1} parent=1 // pred_fallthru
      _
    // Predicated region
    $region6: #{graph_convolution.1} parent=1 // pred_check
      _
    $region7: #{graph_convolution.1} parent=1 // pred_check_branch
      %13 = sbr.rel (0) target = $region9
    $region8: #{graph_convolution.1} parent=1 // pred_region
      _
    $region9: #{graph_convolution.1} parent=1 // pred_fallthru
      _
    // Predicated region
    $region10: #{graph_convolution.1} parent=1 // pred_check
      _
    $region11: #{graph_convolution.1} parent=1 // pred_check_branch
      %15 = sbr.rel (0) target = $region13
    $region12: #{graph_convolution.1} parent=1 // pred_region
      _
    $region13: #{graph_convolution.1} parent=1 // pred_fallthru
      _
    // Predicated region
    $region14: #{graph_convolution.1} parent=1 // pred_check
      _
    $region15: #{graph_convolution.1} parent=1 // pred_check_branch
      %17 = sbr.rel (0) target = $region17
    $region16: #{graph_convolution.1} parent=1 // pred_region
      _
    $region17: #{graph_convolution.1} parent=1 // pred_fallthru
      _
    %p18 = scmp.eq.s32.totalorder 0, 0
    // Predicated region
    $region18: #{graph_convolution.1} parent=1 // pred_check
      %p19 = pneg %p18
    $region19: #{graph_convolution.1} parent=1 // pred_check_branch
      %21 = sbr.rel (%p19) target = $region21
    $region20: #{graph_convolution.1} parent=1 // pred_region
      %22 = vst [vmem:[#allocation2] sm:$0xff] 0.0
      %23 = vst [vmem:[#allocation2 + $0x8] sm:$0xff] 0.0
      %24 = vst [vmem:[#allocation2 + $0x10] sm:$0xff] 0.0
      %25 = vst [vmem:[#allocation2 + $0x18] sm:$0xff] 0.0
      %26 = vst [vmem:[#allocation2 + $0x20] sm:$0xff] 0.0
      %27 = vst [vmem:[#allocation2 + $0x28] sm:$0xff] 0.0
      %28 = vst [vmem:[#allocation2 + $0x30] sm:$0xff] 0.0
      %29 = vst [vmem:[#allocation2 + $0x38] sm:$0xff] 0.0
      %30 = vst [vmem:[#allocation2 + $0x40] sm:$0xff] 0.0
      %31 = vst [vmem:[#allocation2 + $0x48] sm:$0xff] 0.0
      %32 = vst [vmem:[#allocation2 + $0x50] sm:$0xff] 0.0
      %33 = vst [vmem:[#allocation2 + $0x58] sm:$0xff] 0.0
      %34 = vst [vmem:[#allocation2 + $0x60] sm:$0xff] 0.0
      %35 = vst [vmem:[#allocation2 + $0x68] sm:$0xff] 0.0
      %36 = vst [vmem:[#allocation2 + $0x70] sm:$0xff] 0.0
      %37 = vst [vmem:[#allocation2 + $0x78] sm:$0xff] 0.0
      %38 = vst [vmem:[#allocation2 + $0x80] sm:$0xff] 0.0
      %39 = vst [vmem:[#allocation2 + $0x88] sm:$0xff] 0.0
      %40 = vst [vmem:[#allocation2 + $0x90] sm:$0xff] 0.0
      %41 = vst [vmem:[#allocation2 + $0x98] sm:$0xff] 0.0
      %42 = vst [vmem:[#allocation2 + $0xa0] sm:$0xff] 0.0
      %43 = vst [vmem:[#allocation2 + $0xa8] sm:$0xff] 0.0
      %44 = vst [vmem:[#allocation2 + $0xb0] sm:$0xff] 0.0
      %45 = vst [vmem:[#allocation2 + $0xb8] sm:$0xff] 0.0
      %46 = vst [vmem:[#allocation2 + $0xc0] sm:$0xff] 0.0
      %47 = vst [vmem:[#allocation2 + $0xc8] sm:$0xff] 0.0
      %48 = vst [vmem:[#allocation2 + $0xd0] sm:$0xff] 0.0
      %49 = vst [vmem:[#allocation2 + $0xd8] sm:$0xff] 0.0
      %50 = vst [vmem:[#allocation2 + $0xe0] sm:$0xff] 0.0
      %51 = vst [vmem:[#allocation2 + $0xe8] sm:$0xff] 0.0
      %52 = vst [vmem:[#allocation2 + $0xf0] sm:$0xff] 0.0
      %53 = vst [vmem:[#allocation2 + $0xf8] sm:$0xff] 0.0
    $region21: #{graph_convolution.1} parent=1 // pred_fallthru
      _
    %s54 = smul.u32 0, 256
    %s55 = scalar_lea.vmem %s2, %s54
    %v56 = vld [vmem:[%s55] sm:$0xff]
    %v57 = vld [vmem:[%s55 + $0x8] sm:$0xff]
    %v58 = vld [vmem:[%s55 + $0x10] sm:$0xff]
    %v59 = vld [vmem:[%s55 + $0x18] sm:$0xff]
    %v60 = vld [vmem:[%s55 + $0x20] sm:$0xff]
    %v61 = vld [vmem:[%s55 + $0x28] sm:$0xff]
    %v62 = vld [vmem:[%s55 + $0x30] sm:$0xff]
    %v63 = vld [vmem:[%s55 + $0x38] sm:$0xff]
    %v64 = vld [vmem:[%s55 + $0x40] sm:$0xff]
    %v65 = vld [vmem:[%s55 + $0x48] sm:$0xff]
    %v66 = vld [vmem:[%s55 + $0x50] sm:$0xff]
    %v67 = vld [vmem:[%s55 + $0x58] sm:$0xff]
    %v68 = vld [vmem:[%s55 + $0x60] sm:$0xff]
    %v69 = vld [vmem:[%s55 + $0x68] sm:$0xff]
    %v70 = vld [vmem:[%s55 + $0x70] sm:$0xff]
    %v71 = vld [vmem:[%s55 + $0x78] sm:$0xff]
    %v72 = vld [vmem:[%s55 + $0x80] sm:$0xff]
    %v73 = vld [vmem:[%s55 + $0x88] sm:$0xff]
    %v74 = vld [vmem:[%s55 + $0x90] sm:$0xff]
    %v75 = vld [vmem:[%s55 + $0x98] sm:$0xff]
    %v76 = vld [vmem:[%s55 + $0xa0] sm:$0xff]
    %v77 = vld [vmem:[%s55 + $0xa8] sm:$0xff]
    %v78 = vld [vmem:[%s55 + $0xb0] sm:$0xff]
    %v79 = vld [vmem:[%s55 + $0xb8] sm:$0xff]
    %v80 = vld [vmem:[%s55 + $0xc0] sm:$0xff]
    %v81 = vld [vmem:[%s55 + $0xc8] sm:$0xff]
    %v82 = vld [vmem:[%s55 + $0xd0] sm:$0xff]
    %v83 = vld [vmem:[%s55 + $0xd8] sm:$0xff]
    %v84 = vld [vmem:[%s55 + $0xe0] sm:$0xff]
    %v85 = vld [vmem:[%s55 + $0xe8] sm:$0xff]
    %v86 = vld [vmem:[%s55 + $0xf0] sm:$0xff]
    %v87 = vld [vmem:[%s55 + $0xf8] sm:$0xff]
    %v88 = vld [vmem:[%s1] sm:$0xff]
    %v89 = vld [vmem:[%s1 + $0x8] sm:$0xff]
    %v90 = vld [vmem:[%s1 + $0x10] sm:$0xff]
    %v91 = vld [vmem:[%s1 + $0x18] sm:$0xff]
    %v92 = vld [vmem:[%s1 + $0x20] sm:$0xff]
    %v93 = vld [vmem:[%s1 + $0x28] sm:$0xff]
    %v94 = vld [vmem:[%s1 + $0x30] sm:$0xff]
    %v95 = vld [vmem:[%s1 + $0x38] sm:$0xff]
    %v96 = vld [vmem:[%s1 + $0x40] sm:$0xff]
    %v97 = vld [vmem:[%s1 + $0x48] sm:$0xff]
    %v98 = vld [vmem:[%s1 + $0x50] sm:$0xff]
    %v99 = vld [vmem:[%s1 + $0x58] sm:$0xff]
    %v100 = vld [vmem:[%s1 + $0x60] sm:$0xff]
    %v101 = vld [vmem:[%s1 + $0x68] sm:$0xff]
    %v102 = vld [vmem:[%s1 + $0x70] sm:$0xff]
    %v103 = vld [vmem:[%s1 + $0x78] sm:$0xff]
    %v104 = vld [vmem:[%s1 + $0x80] sm:$0xff]
    %v105 = vld [vmem:[%s1 + $0x88] sm:$0xff]
    %v106 = vld [vmem:[%s1 + $0x90] sm:$0xff]
    %v107 = vld [vmem:[%s1 + $0x98] sm:$0xff]
    %v108 = vld [vmem:[%s1 + $0xa0] sm:$0xff]
    %v109 = vld [vmem:[%s1 + $0xa8] sm:$0xff]
    %v110 = vld [vmem:[%s1 + $0xb0] sm:$0xff]
    %v111 = vld [vmem:[%s1 + $0xb8] sm:$0xff]
    %v112 = vld [vmem:[%s1 + $0xc0] sm:$0xff]
    %v113 = vld [vmem:[%s1 + $0xc8] sm:$0xff]
    %v114 = vld [vmem:[%s1 + $0xd0] sm:$0xff]
    %v115 = vld [vmem:[%s1 + $0xd8] sm:$0xff]
    %v116 = vld [vmem:[%s1 + $0xe0] sm:$0xff]
    %v117 = vld [vmem:[%s1 + $0xe8] sm:$0xff]
    %v118 = vld [vmem:[%s1 + $0xf0] sm:$0xff]
    %v119 = vld [vmem:[%s1 + $0xf8] sm:$0xff]
    %121 = vset.pattern.permute.xlu0 0
    %122 = vperm.xlu0 %121, %v56
    %v123 = vpop.permute.xlu0 %122
    %126 = vset.pattern.permute.xlu0 0
    %127 = vperm.xlu0 %126, %v57
    %v128 = vpop.permute.xlu0 %127
    %131 = vset.pattern.permute.xlu0 0
    %132 = vperm.xlu0 %131, %v58
    %v133 = vpop.permute.xlu0 %132
    %136 = vset.pattern.permute.xlu0 0
    %137 = vperm.xlu0 %136, %v59
    %v138 = vpop.permute.xlu0 %137
    %141 = vset.pattern.permute.xlu0 0
    %142 = vperm.xlu0 %141, %v60
    %v143 = vpop.permute.xlu0 %142
    %146 = vset.pattern.permute.xlu0 0
    %147 = vperm.xlu0 %146, %v61
    %v148 = vpop.permute.xlu0 %147
    %151 = vset.pattern.permute.xlu0 0
    %152 = vperm.xlu0 %151, %v62
    %v153 = vpop.permute.xlu0 %152
    %156 = vset.pattern.permute.xlu0 0
    %157 = vperm.xlu0 %156, %v63
    %v158 = vpop.permute.xlu0 %157
    %161 = vset.pattern.permute.xlu0 0
    %162 = vperm.xlu0 %161, %v64
    %v163 = vpop.permute.xlu0 %162
    %166 = vset.pattern.permute.xlu0 0
    %167 = vperm.xlu0 %166, %v65
    %v168 = vpop.permute.xlu0 %167
    %171 = vset.pattern.permute.xlu0 0
    %172 = vperm.xlu0 %171, %v66
    %v173 = vpop.permute.xlu0 %172
    %176 = vset.pattern.permute.xlu0 0
    %177 = vperm.xlu0 %176, %v67
    %v178 = vpop.permute.xlu0 %177
    %181 = vset.pattern.permute.xlu0 0
    %182 = vperm.xlu0 %181, %v68
    %v183 = vpop.permute.xlu0 %182
    %186 = vset.pattern.permute.xlu0 0
    %187 = vperm.xlu0 %186, %v69
    %v188 = vpop.permute.xlu0 %187
    %191 = vset.pattern.permute.xlu0 0
    %192 = vperm.xlu0 %191, %v70
    %v193 = vpop.permute.xlu0 %192
    %196 = vset.pattern.permute.xlu0 0
    %197 = vperm.xlu0 %196, %v71
    %v198 = vpop.permute.xlu0 %197
    %201 = vset.pattern.permute.xlu0 0
    %202 = vperm.xlu0 %201, %v72
    %v203 = vpop.permute.xlu0 %202
    %206 = vset.pattern.permute.xlu0 0
    %207 = vperm.xlu0 %206, %v73
    %v208 = vpop.permute.xlu0 %207
    %211 = vset.pattern.permute.xlu0 0
    %212 = vperm.xlu0 %211, %v74
    %v213 = vpop.permute.xlu0 %212
    %216 = vset.pattern.permute.xlu0 0
    %217 = vperm.xlu0 %216, %v75
    %v218 = vpop.permute.xlu0 %217
    %221 = vset.pattern.permute.xlu0 0
    %222 = vperm.xlu0 %221, %v76
    %v223 = vpop.permute.xlu0 %222
    %226 = vset.pattern.permute.xlu0 0
    %227 = vperm.xlu0 %226, %v77
    %v228 = vpop.permute.xlu0 %227
    %231 = vset.pattern.permute.xlu0 0
    %232 = vperm.xlu0 %231, %v78
    %v233 = vpop.permute.xlu0 %232
    %236 = vset.pattern.permute.xlu0 0
    %237 = vperm.xlu0 %236, %v79
    %v238 = vpop.permute.xlu0 %237
    %241 = vset.pattern.permute.xlu0 0
    %242 = vperm.xlu0 %241, %v80
    %v243 = vpop.permute.xlu0 %242
    %246 = vset.pattern.permute.xlu0 0
    %247 = vperm.xlu0 %246, %v81
    %v248 = vpop.permute.xlu0 %247
    %251 = vset.pattern.permute.xlu0 0
    %252 = vperm.xlu0 %251, %v82
    %v253 = vpop.permute.xlu0 %252
    %256 = vset.pattern.permute.xlu0 0
    %257 = vperm.xlu0 %256, %v83
    %v258 = vpop.permute.xlu0 %257
    %261 = vset.pattern.permute.xlu0 0
    %262 = vperm.xlu0 %261, %v84
    %v263 = vpop.permute.xlu0 %262
    %266 = vset.pattern.permute.xlu0 0
    %267 = vperm.xlu0 %266, %v85
    %v268 = vpop.permute.xlu0 %267
    %271 = vset.pattern.permute.xlu0 0
    %272 = vperm.xlu0 %271, %v86
    %v273 = vpop.permute.xlu0 %272
    %276 = vset.pattern.permute.xlu0 0
    %277 = vperm.xlu0 %276, %v87
    %v278 = vpop.permute.xlu0 %277
    %v280 = vmul.f32 %v88, %v123
    %v281 = vmul.f32 %v89, %v128
    %v282 = vmul.f32 %v90, %v133
    %v283 = vmul.f32 %v91, %v138
    %v284 = vmul.f32 %v92, %v143
    %v285 = vmul.f32 %v93, %v148
    %v286 = vmul.f32 %v94, %v153
    %v287 = vmul.f32 %v95, %v158
    %v288 = vmul.f32 %v96, %v163
    %v289 = vmul.f32 %v97, %v168
    %v290 = vmul.f32 %v98, %v173
    %v291 = vmul.f32 %v99, %v178
    %v292 = vmul.f32 %v100, %v183
    %v293 = vmul.f32 %v101, %v188
    %v294 = vmul.f32 %v102, %v193
    %v295 = vmul.f32 %v103, %v198
    %v296 = vmul.f32 %v104, %v203
    %v297 = vmul.f32 %v105, %v208
    %v298 = vmul.f32 %v106, %v213
    %v299 = vmul.f32 %v107, %v218
    %v300 = vmul.f32 %v108, %v223
    %v301 = vmul.f32 %v109, %v228
    %v302 = vmul.f32 %v110, %v233
    %v303 = vmul.f32 %v111, %v238
    %v304 = vmul.f32 %v112, %v243
    %v305 = vmul.f32 %v113, %v248
    %v306 = vmul.f32 %v114, %v253
    %v307 = vmul.f32 %v115, %v258
    %v308 = vmul.f32 %v116, %v263
    %v309 = vmul.f32 %v117, %v268
    %v310 = vmul.f32 %v118, %v273
    %v311 = vmul.f32 %v119, %v278
    %v312 = vpack.c.bf16 %v281, %v280
    %v313 = vpack.c.bf16 %v283, %v282
    %v314 = vpack.c.bf16 %v285, %v284
    %v315 = vpack.c.bf16 %v287, %v286
    %v316 = vpack.c.bf16 %v289, %v288
    %v317 = vpack.c.bf16 %v291, %v290
    %v318 = vpack.c.bf16 %v293, %v292
    %v319 = vpack.c.bf16 %v295, %v294
    %v320 = vpack.c.bf16 %v297, %v296
    %v321 = vpack.c.bf16 %v299, %v298
    %v322 = vpack.c.bf16 %v301, %v300
    %v323 = vpack.c.bf16 %v303, %v302
    %v324 = vpack.c.bf16 %v305, %v304
    %v325 = vpack.c.bf16 %v307, %v306
    %v326 = vpack.c.bf16 %v309, %v308
    %v327 = vpack.c.bf16 %v311, %v310
    %v328 = vld [vmem:[#allocation2] sm:$0xff]
    %v329 = vld [vmem:[#allocation2 + $0x8] sm:$0xff]
    %v330 = vld [vmem:[#allocation2 + $0x10] sm:$0xff]
    %v331 = vld [vmem:[#allocation2 + $0x18] sm:$0xff]
    %v332 = vld [vmem:[#allocation2 + $0x20] sm:$0xff]
    %v333 = vld [vmem:[#allocation2 + $0x28] sm:$0xff]
    %v334 = vld [vmem:[#allocation2 + $0x30] sm:$0xff]
    %v335 = vld [vmem:[#allocation2 + $0x38] sm:$0xff]
    %v336 = vld [vmem:[#allocation2 + $0x40] sm:$0xff]
    %v337 = vld [vmem:[#allocation2 + $0x48] sm:$0xff]
    %v338 = vld [vmem:[#allocation2 + $0x50] sm:$0xff]
    %v339 = vld [vmem:[#allocation2 + $0x58] sm:$0xff]
    %v340 = vld [vmem:[#allocation2 + $0x60] sm:$0xff]
    %v341 = vld [vmem:[#allocation2 + $0x68] sm:$0xff]
    %v342 = vld [vmem:[#allocation2 + $0x70] sm:$0xff]
    %v343 = vld [vmem:[#allocation2 + $0x78] sm:$0xff]
    %v344 = vld [vmem:[#allocation2 + $0x80] sm:$0xff]
    %v345 = vld [vmem:[#allocation2 + $0x88] sm:$0xff]
    %v346 = vld [vmem:[#allocation2 + $0x90] sm:$0xff]
    %v347 = vld [vmem:[#allocation2 + $0x98] sm:$0xff]
    %v348 = vld [vmem:[#allocation2 + $0xa0] sm:$0xff]
    %v349 = vld [vmem:[#allocation2 + $0xa8] sm:$0xff]
    %v350 = vld [vmem:[#allocation2 + $0xb0] sm:$0xff]
    %v351 = vld [vmem:[#allocation2 + $0xb8] sm:$0xff]
    %v352 = vld [vmem:[#allocation2 + $0xc0] sm:$0xff]
    %v353 = vld [vmem:[#allocation2 + $0xc8] sm:$0xff]
    %v354 = vld [vmem:[#allocation2 + $0xd0] sm:$0xff]
    %v355 = vld [vmem:[#allocation2 + $0xd8] sm:$0xff]
    %v356 = vld [vmem:[#allocation2 + $0xe0] sm:$0xff]
    %v357 = vld [vmem:[#allocation2 + $0xe8] sm:$0xff]
    %v358 = vld [vmem:[#allocation2 + $0xf0] sm:$0xff]
    %v359 = vld [vmem:[#allocation2 + $0xf8] sm:$0xff]
    %v360 = vld [vmem:[%s0] sm:$0xff]
    %v361 = vld [vmem:[%s0 + $0x8] sm:$0xff]
    %v362 = vld [vmem:[%s0 + $0x10] sm:$0xff]
    %v363 = vld [vmem:[%s0 + $0x18] sm:$0xff]
    %v364 = vld [vmem:[%s0 + $0x20] sm:$0xff]
    %v365 = vld [vmem:[%s0 + $0x28] sm:$0xff]
    %v366 = vld [vmem:[%s0 + $0x30] sm:$0xff]
    %v367 = vld [vmem:[%s0 + $0x38] sm:$0xff]
    %v368 = vld [vmem:[%s0 + $0x40] sm:$0xff]
    %v369 = vld [vmem:[%s0 + $0x48] sm:$0xff]
    %v370 = vld [vmem:[%s0 + $0x50] sm:$0xff]
    %v371 = vld [vmem:[%s0 + $0x58] sm:$0xff]
    %v372 = vld [vmem:[%s0 + $0x60] sm:$0xff]
    %v373 = vld [vmem:[%s0 + $0x68] sm:$0xff]
    %v374 = vld [vmem:[%s0 + $0x70] sm:$0xff]
    %v375 = vld [vmem:[%s0 + $0x78] sm:$0xff]
    %v376 = vld [vmem:[%s0 + $0x80] sm:$0xff]
    %v377 = vld [vmem:[%s0 + $0x88] sm:$0xff]
    %v378 = vld [vmem:[%s0 + $0x90] sm:$0xff]
    %v379 = vld [vmem:[%s0 + $0x98] sm:$0xff]
    %v380 = vld [vmem:[%s0 + $0xa0] sm:$0xff]
    %v381 = vld [vmem:[%s0 + $0xa8] sm:$0xff]
    %v382 = vld [vmem:[%s0 + $0xb0] sm:$0xff]
    %v383 = vld [vmem:[%s0 + $0xb8] sm:$0xff]
    %v384 = vld [vmem:[%s0 + $0xc0] sm:$0xff]
    %v385 = vld [vmem:[%s0 + $0xc8] sm:$0xff]
    %v386 = vld [vmem:[%s0 + $0xd0] sm:$0xff]
    %v387 = vld [vmem:[%s0 + $0xd8] sm:$0xff]
    %v388 = vld [vmem:[%s0 + $0xe0] sm:$0xff]
    %v389 = vld [vmem:[%s0 + $0xe8] sm:$0xff]
    %v390 = vld [vmem:[%s0 + $0xf0] sm:$0xff]
    %v391 = vld [vmem:[%s0 + $0xf8] sm:$0xff]
    %v424 = vunpack.c.l.b16 %v360
    %v425 = vunpack.c.h.b16 %v360
    %v426 = vunpack.c.l.b16 %v361
    %v427 = vunpack.c.h.b16 %v361
    %v428 = vunpack.c.l.b16 %v362
    %v429 = vunpack.c.h.b16 %v362
    %v430 = vunpack.c.l.b16 %v363
    %v431 = vunpack.c.h.b16 %v363
    %v432 = vunpack.c.l.b16 %v364
    %v433 = vunpack.c.h.b16 %v364
    %v434 = vunpack.c.l.b16 %v365
    %v435 = vunpack.c.h.b16 %v365
    %v436 = vunpack.c.l.b16 %v366
    %v437 = vunpack.c.h.b16 %v366
    %v438 = vunpack.c.l.b16 %v367
    %v439 = vunpack.c.h.b16 %v367
    %v440 = vunpack.c.l.b16 %v368
    %v441 = vunpack.c.h.b16 %v368
    %v442 = vunpack.c.l.b16 %v369
    %v443 = vunpack.c.h.b16 %v369
    %v444 = vunpack.c.l.b16 %v370
    %v445 = vunpack.c.h.b16 %v370
    %v446 = vunpack.c.l.b16 %v371
    %v447 = vunpack.c.h.b16 %v371
    %v448 = vunpack.c.l.b16 %v372
    %v449 = vunpack.c.h.b16 %v372
    %v450 = vunpack.c.l.b16 %v373
    %v451 = vunpack.c.h.b16 %v373
    %v452 = vunpack.c.l.b16 %v374
    %v453 = vunpack.c.h.b16 %v374
    %v454 = vunpack.c.l.b16 %v375
    %v455 = vunpack.c.h.b16 %v375
    %v456 = vunpack.c.l.b16 %v376
    %v457 = vunpack.c.h.b16 %v376
    %v458 = vunpack.c.l.b16 %v377
    %v459 = vunpack.c.h.b16 %v377
    %v460 = vunpack.c.l.b16 %v378
    %v461 = vunpack.c.h.b16 %v378
    %v462 = vunpack.c.l.b16 %v379
    %v463 = vunpack.c.h.b16 %v379
    %v464 = vunpack.c.l.b16 %v380
    %v465 = vunpack.c.h.b16 %v380
    %v466 = vunpack.c.l.b16 %v381
    %v467 = vunpack.c.h.b16 %v381
    %v468 = vunpack.c.l.b16 %v382
    %v469 = vunpack.c.h.b16 %v382
    %v470 = vunpack.c.l.b16 %v383
    %v471 = vunpack.c.h.b16 %v383
    %v472 = vunpack.c.l.b16 %v384
    %v473 = vunpack.c.h.b16 %v384
    %v474 = vunpack.c.l.b16 %v385
    %v475 = vunpack.c.h.b16 %v385
    %v476 = vunpack.c.l.b16 %v386
    %v477 = vunpack.c.h.b16 %v386
    %v478 = vunpack.c.l.b16 %v387
    %v479 = vunpack.c.h.b16 %v387
    %v480 = vunpack.c.l.b16 %v388
    %v481 = vunpack.c.h.b16 %v388
    %v482 = vunpack.c.l.b16 %v389
    %v483 = vunpack.c.h.b16 %v389
    %v484 = vunpack.c.l.b16 %v390
    %v485 = vunpack.c.h.b16 %v390
    %v486 = vunpack.c.l.b16 %v391
    %v487 = vunpack.c.h.b16 %v391
    %v488 = vpack.c.b16 %v426, %v424
    %v489 = vpack.c.b16 %v427, %v425
    %v490 = vpack.c.b16 %v430, %v428
    %v491 = vpack.c.b16 %v431, %v429
    %v492 = vpack.c.b16 %v434, %v432
    %v493 = vpack.c.b16 %v435, %v433
    %v494 = vpack.c.b16 %v438, %v436
    %v495 = vpack.c.b16 %v439, %v437
    %v496 = vpack.c.b16 %v442, %v440
    %v497 = vpack.c.b16 %v443, %v441
    %v498 = vpack.c.b16 %v446, %v444
    %v499 = vpack.c.b16 %v447, %v445
    %v500 = vpack.c.b16 %v450, %v448
    %v501 = vpack.c.b16 %v451, %v449
    %v502 = vpack.c.b16 %v454, %v452
    %v503 = vpack.c.b16 %v455, %v453
    %v504 = vpack.c.b16 %v458, %v456
    %v505 = vpack.c.b16 %v459, %v457
    %v506 = vpack.c.b16 %v462, %v460
    %v507 = vpack.c.b16 %v463, %v461
    %v508 = vpack.c.b16 %v466, %v464
    %v509 = vpack.c.b16 %v467, %v465
    %v510 = vpack.c.b16 %v470, %v468
    %v511 = vpack.c.b16 %v471, %v469
    %v512 = vpack.c.b16 %v474, %v472
    %v513 = vpack.c.b16 %v475, %v473
    %v514 = vpack.c.b16 %v478, %v476
    %v515 = vpack.c.b16 %v479, %v477
    %v516 = vpack.c.b16 %v482, %v480
    %v517 = vpack.c.b16 %v483, %v481
    %v518 = vpack.c.b16 %v486, %v484
    %v519 = vpack.c.b16 %v487, %v485
    %552 = vmatpush.bf16.msra.mxu0 %v319
    %553 = vmatpush.bf16.msra.mxu0 %v318
    %554 = vmatpush.bf16.msra.mxu0 %v317
    %555 = vmatpush.bf16.msra.mxu0 %v316
    %556 = vmatpush.bf16.msra.mxu0 %v315
    %557 = vmatpush.bf16.msra.mxu0 %v314
    %558 = vmatpush.bf16.msra.mxu0 %v313
    %559 = vmatpush.bf16.msra.mxu0 %v312
    %560 = vmatmul.bf16.gmra.mxu0 %v488
    %v561 = vpop.f32.mrf.mxu0
    %v562 = vadd.f32 0.0, %v561
    %v563 = vpop.f32.mrf.mxu0
    %v564 = vadd.f32 0.0, %v563
    %565 = vmatmul.bf16.gmra.mxu0 %v490
    %v566 = vpop.f32.mrf.mxu0
    %v567 = vadd.f32 0.0, %v566
    %v568 = vpop.f32.mrf.mxu0
    %v569 = vadd.f32 0.0, %v568
    %570 = vmatmul.bf16.gmra.mxu0 %v492
    %v571 = vpop.f32.mrf.mxu0
    %v572 = vadd.f32 0.0, %v571
    %v573 = vpop.f32.mrf.mxu0
    %v574 = vadd.f32 0.0, %v573
    %575 = vmatmul.bf16.gmra.mxu0 %v494
    %v576 = vpop.f32.mrf.mxu0
    %v577 = vadd.f32 0.0, %v576
    %v578 = vpop.f32.mrf.mxu0
    %v579 = vadd.f32 0.0, %v578
    %580 = vmatmul.bf16.gmra.mxu0 %v496
    %v581 = vpop.f32.mrf.mxu0
    %v582 = vadd.f32 0.0, %v581
    %v583 = vpop.f32.mrf.mxu0
    %v584 = vadd.f32 0.0, %v583
    %585 = vmatmul.bf16.gmra.mxu0 %v498
    %v586 = vpop.f32.mrf.mxu0
    %v587 = vadd.f32 0.0, %v586
    %v588 = vpop.f32.mrf.mxu0
    %v589 = vadd.f32 0.0, %v588
    %590 = vmatmul.bf16.gmra.mxu0 %v500
    %v591 = vpop.f32.mrf.mxu0
    %v592 = vadd.f32 0.0, %v591
    %v593 = vpop.f32.mrf.mxu0
    %v594 = vadd.f32 0.0, %v593
    %595 = vmatmul.bf16.gmra.mxu0 %v502
    %v596 = vpop.f32.mrf.mxu0
    %v597 = vadd.f32 0.0, %v596
    %v598 = vpop.f32.mrf.mxu0
    %v599 = vadd.f32 0.0, %v598
    %600 = vmatmul.bf16.gmra.mxu0 %v504
    %v601 = vpop.f32.mrf.mxu0
    %v602 = vadd.f32 0.0, %v601
    %v603 = vpop.f32.mrf.mxu0
    %v604 = vadd.f32 0.0, %v603
    %605 = vmatmul.bf16.gmra.mxu0 %v506
    %v606 = vpop.f32.mrf.mxu0
    %v607 = vadd.f32 0.0, %v606
    %v608 = vpop.f32.mrf.mxu0
    %v609 = vadd.f32 0.0, %v608
    %610 = vmatmul.bf16.gmra.mxu0 %v508
    %v611 = vpop.f32.mrf.mxu0
    %v612 = vadd.f32 0.0, %v611
    %v613 = vpop.f32.mrf.mxu0
    %v614 = vadd.f32 0.0, %v613
    %615 = vmatmul.bf16.gmra.mxu0 %v510
    %v616 = vpop.f32.mrf.mxu0
    %v617 = vadd.f32 0.0, %v616
    %v618 = vpop.f32.mrf.mxu0
    %v619 = vadd.f32 0.0, %v618
    %620 = vmatmul.bf16.gmra.mxu0 %v512
    %v621 = vpop.f32.mrf.mxu0
    %v622 = vadd.f32 0.0, %v621
    %v623 = vpop.f32.mrf.mxu0
    %v624 = vadd.f32 0.0, %v623
    %625 = vmatmul.bf16.gmra.mxu0 %v514
    %v626 = vpop.f32.mrf.mxu0
    %v627 = vadd.f32 0.0, %v626
    %v628 = vpop.f32.mrf.mxu0
    %v629 = vadd.f32 0.0, %v628
    %630 = vmatmul.bf16.gmra.mxu0 %v516
    %v631 = vpop.f32.mrf.mxu0
    %v632 = vadd.f32 0.0, %v631
    %v633 = vpop.f32.mrf.mxu0
    %v634 = vadd.f32 0.0, %v633
    %635 = vmatmul.bf16.gmra.mxu0 %v518
    %v636 = vpop.f32.mrf.mxu0
    %v637 = vadd.f32 0.0, %v636
    %v638 = vpop.f32.mrf.mxu0
    %v639 = vadd.f32 0.0, %v638
    %640 = vdwg.mxu0
    %641 = vmatpush.bf16.msra.mxu0 %v327
    %642 = vmatpush.bf16.msra.mxu0 %v326
    %643 = vmatpush.bf16.msra.mxu0 %v325
    %644 = vmatpush.bf16.msra.mxu0 %v324
    %645 = vmatpush.bf16.msra.mxu0 %v323
    %646 = vmatpush.bf16.msra.mxu0 %v322
    %647 = vmatpush.bf16.msra.mxu0 %v321
    %648 = vmatpush.bf16.msra.mxu0 %v320
    %649 = vmatmul.bf16.gmra.mxu0 %v489
    %v650 = vpop.f32.mrf.mxu0
    %v651 = vadd.f32 %v562, %v650
    %v652 = vpop.f32.mrf.mxu0
    %v653 = vadd.f32 %v564, %v652
    %654 = vmatmul.bf16.gmra.mxu0 %v491
    %v655 = vpop.f32.mrf.mxu0
    %v656 = vadd.f32 %v567, %v655
    %v657 = vpop.f32.mrf.mxu0
    %v658 = vadd.f32 %v569, %v657
    %659 = vmatmul.bf16.gmra.mxu0 %v493
    %v660 = vpop.f32.mrf.mxu0
    %v661 = vadd.f32 %v572, %v660
    %v662 = vpop.f32.mrf.mxu0
    %v663 = vadd.f32 %v574, %v662
    %664 = vmatmul.bf16.gmra.mxu0 %v495
    %v665 = vpop.f32.mrf.mxu0
    %v666 = vadd.f32 %v577, %v665
    %v667 = vpop.f32.mrf.mxu0
    %v668 = vadd.f32 %v579, %v667
    %669 = vmatmul.bf16.gmra.mxu0 %v497
    %v670 = vpop.f32.mrf.mxu0
    %v671 = vadd.f32 %v582, %v670
    %v672 = vpop.f32.mrf.mxu0
    %v673 = vadd.f32 %v584, %v672
    %674 = vmatmul.bf16.gmra.mxu0 %v499
    %v675 = vpop.f32.mrf.mxu0
    %v676 = vadd.f32 %v587, %v675
    %v677 = vpop.f32.mrf.mxu0
    %v678 = vadd.f32 %v589, %v677
    %679 = vmatmul.bf16.gmra.mxu0 %v501
    %v680 = vpop.f32.mrf.mxu0
    %v681 = vadd.f32 %v592, %v680
    %v682 = vpop.f32.mrf.mxu0
    %v683 = vadd.f32 %v594, %v682
    %684 = vmatmul.bf16.gmra.mxu0 %v503
    %v685 = vpop.f32.mrf.mxu0
    %v686 = vadd.f32 %v597, %v685
    %v687 = vpop.f32.mrf.mxu0
    %v688 = vadd.f32 %v599, %v687
    %689 = vmatmul.bf16.gmra.mxu0 %v505
    %v690 = vpop.f32.mrf.mxu0
    %v691 = vadd.f32 %v602, %v690
    %v692 = vpop.f32.mrf.mxu0
    %v693 = vadd.f32 %v604, %v692
    %694 = vmatmul.bf16.gmra.mxu0 %v507
    %v695 = vpop.f32.mrf.mxu0
    %v696 = vadd.f32 %v607, %v695
    %v697 = vpop.f32.mrf.mxu0
    %v698 = vadd.f32 %v609, %v697
    %699 = vmatmul.bf16.gmra.mxu0 %v509
    %v700 = vpop.f32.mrf.mxu0
    %v701 = vadd.f32 %v612, %v700
    %v702 = vpop.f32.mrf.mxu0
    %v703 = vadd.f32 %v614, %v702
    %704 = vmatmul.bf16.gmra.mxu0 %v511
    %v705 = vpop.f32.mrf.mxu0
    %v706 = vadd.f32 %v617, %v705
    %v707 = vpop.f32.mrf.mxu0
    %v708 = vadd.f32 %v619, %v707
    %709 = vmatmul.bf16.gmra.mxu0 %v513
    %v710 = vpop.f32.mrf.mxu0
    %v711 = vadd.f32 %v622, %v710
    %v712 = vpop.f32.mrf.mxu0
    %v713 = vadd.f32 %v624, %v712
    %714 = vmatmul.bf16.gmra.mxu0 %v515
    %v715 = vpop.f32.mrf.mxu0
    %v716 = vadd.f32 %v627, %v715
    %v717 = vpop.f32.mrf.mxu0
    %v718 = vadd.f32 %v629, %v717
    %719 = vmatmul.bf16.gmra.mxu0 %v517
    %v720 = vpop.f32.mrf.mxu0
    %v721 = vadd.f32 %v632, %v720
    %v722 = vpop.f32.mrf.mxu0
    %v723 = vadd.f32 %v634, %v722
    %724 = vmatmul.bf16.gmra.mxu0 %v519
    %v725 = vpop.f32.mrf.mxu0
    %v726 = vadd.f32 %v637, %v725
    %v727 = vpop.f32.mrf.mxu0
    %v728 = vadd.f32 %v639, %v727
    %729 = vdwg.mxu0
    %v730 = vadd.f32 %v328, %v651
    %v731 = vadd.f32 %v329, %v653
    %v732 = vadd.f32 %v330, %v656
    %v733 = vadd.f32 %v331, %v658
    %v734 = vadd.f32 %v332, %v661
    %v735 = vadd.f32 %v333, %v663
    %v736 = vadd.f32 %v334, %v666
    %v737 = vadd.f32 %v335, %v668
    %v738 = vadd.f32 %v336, %v671
    %v739 = vadd.f32 %v337, %v673
    %v740 = vadd.f32 %v338, %v676
    %v741 = vadd.f32 %v339, %v678
    %v742 = vadd.f32 %v340, %v681
    %v743 = vadd.f32 %v341, %v683
    %v744 = vadd.f32 %v342, %v686
    %v745 = vadd.f32 %v343, %v688
    %v746 = vadd.f32 %v344, %v691
    %v747 = vadd.f32 %v345, %v693
    %v748 = vadd.f32 %v346, %v696
    %v749 = vadd.f32 %v347, %v698
    %v750 = vadd.f32 %v348, %v701
    %v751 = vadd.f32 %v349, %v703
    %v752 = vadd.f32 %v350, %v706
    %v753 = vadd.f32 %v351, %v708
    %v754 = vadd.f32 %v352, %v711
    %v755 = vadd.f32 %v353, %v713
    %v756 = vadd.f32 %v354, %v716
    %v757 = vadd.f32 %v355, %v718
    %v758 = vadd.f32 %v356, %v721
    %v759 = vadd.f32 %v357, %v723
    %v760 = vadd.f32 %v358, %v726
    %v761 = vadd.f32 %v359, %v728
    %762 = vst [vmem:[#allocation2] sm:$0xff] %v730
    %763 = vst [vmem:[#allocation2 + $0x8] sm:$0xff] %v731
    %764 = vst [vmem:[#allocation2 + $0x10] sm:$0xff] %v732
    %765 = vst [vmem:[#allocation2 + $0x18] sm:$0xff] %v733
    %766 = vst [vmem:[#allocation2 + $0x20] sm:$0xff] %v734
    %767 = vst [vmem:[#allocation2 + $0x28] sm:$0xff] %v735
    %768 = vst [vmem:[#allocation2 + $0x30] sm:$0xff] %v736
    %769 = vst [vmem:[#allocation2 + $0x38] sm:$0xff] %v737
    %770 = vst [vmem:[#allocation2 + $0x40] sm:$0xff] %v738
    %771 = vst [vmem:[#allocation2 + $0x48] sm:$0xff] %v739
    %772 = vst [vmem:[#allocation2 + $0x50] sm:$0xff] %v740
    %773 = vst [vmem:[#allocation2 + $0x58] sm:$0xff] %v741
    %774 = vst [vmem:[#allocation2 + $0x60] sm:$0xff] %v742
    %775 = vst [vmem:[#allocation2 + $0x68] sm:$0xff] %v743
    %776 = vst [vmem:[#allocation2 + $0x70] sm:$0xff] %v744
    %777 = vst [vmem:[#allocation2 + $0x78] sm:$0xff] %v745
    %778 = vst [vmem:[#allocation2 + $0x80] sm:$0xff] %v746
    %779 = vst [vmem:[#allocation2 + $0x88] sm:$0xff] %v747
    %780 = vst [vmem:[#allocation2 + $0x90] sm:$0xff] %v748
    %781 = vst [vmem:[#allocation2 + $0x98] sm:$0xff] %v749
    %782 = vst [vmem:[#allocation2 + $0xa0] sm:$0xff] %v750
    %783 = vst [vmem:[#allocation2 + $0xa8] sm:$0xff] %v751
    %784 = vst [vmem:[#allocation2 + $0xb0] sm:$0xff] %v752
    %785 = vst [vmem:[#allocation2 + $0xb8] sm:$0xff] %v753
    %786 = vst [vmem:[#allocation2 + $0xc0] sm:$0xff] %v754
    %787 = vst [vmem:[#allocation2 + $0xc8] sm:$0xff] %v755
    %788 = vst [vmem:[#allocation2 + $0xd0] sm:$0xff] %v756
    %789 = vst [vmem:[#allocation2 + $0xd8] sm:$0xff] %v757
    %790 = vst [vmem:[#allocation2 + $0xe0] sm:$0xff] %v758
    %791 = vst [vmem:[#allocation2 + $0xe8] sm:$0xff] %v759
    %792 = vst [vmem:[#allocation2 + $0xf0] sm:$0xff] %v760
    %793 = vst [vmem:[#allocation2 + $0xf8] sm:$0xff] %v761
    // Predicated region
    $region22: #{graph_convolution.1} parent=1 // pred_check
      %p794 = pneg %p18
    $region23: #{graph_convolution.1} parent=1 // pred_check_branch
      %796 = sbr.rel (%p794) target = $region25
    $region24: #{graph_convolution.1} parent=1 // pred_region
      %s797 = smul.u32 0, 256
      %s798 = scalar_lea.vmem %s3, %s797
      %v799 = vld [vmem:[%s798] sm:$0xff]
      %v800 = vld [vmem:[%s798 + $0x8] sm:$0xff]
      %v801 = vld [vmem:[%s798 + $0x10] sm:$0xff]
      %v802 = vld [vmem:[%s798 + $0x18] sm:$0xff]
      %v803 = vld [vmem:[%s798 + $0x20] sm:$0xff]
      %v804 = vld [vmem:[%s798 + $0x28] sm:$0xff]
      %v805 = vld [vmem:[%s798 + $0x30] sm:$0xff]
      %v806 = vld [vmem:[%s798 + $0x38] sm:$0xff]
      %v807 = vld [vmem:[%s798 + $0x40] sm:$0xff]
      %v808 = vld [vmem:[%s798 + $0x48] sm:$0xff]
      %v809 = vld [vmem:[%s798 + $0x50] sm:$0xff]
      %v810 = vld [vmem:[%s798 + $0x58] sm:$0xff]
      %v811 = vld [vmem:[%s798 + $0x60] sm:$0xff]
      %v812 = vld [vmem:[%s798 + $0x68] sm:$0xff]
      %v813 = vld [vmem:[%s798 + $0x70] sm:$0xff]
      %v814 = vld [vmem:[%s798 + $0x78] sm:$0xff]
      %v815 = vld [vmem:[%s798 + $0x80] sm:$0xff]
      %v816 = vld [vmem:[%s798 + $0x88] sm:$0xff]
      %v817 = vld [vmem:[%s798 + $0x90] sm:$0xff]
      %v818 = vld [vmem:[%s798 + $0x98] sm:$0xff]
      %v819 = vld [vmem:[%s798 + $0xa0] sm:$0xff]
      %v820 = vld [vmem:[%s798 + $0xa8] sm:$0xff]
      %v821 = vld [vmem:[%s798 + $0xb0] sm:$0xff]
      %v822 = vld [vmem:[%s798 + $0xb8] sm:$0xff]
      %v823 = vld [vmem:[%s798 + $0xc0] sm:$0xff]
      %v824 = vld [vmem:[%s798 + $0xc8] sm:$0xff]
      %v825 = vld [vmem:[%s798 + $0xd0] sm:$0xff]
      %v826 = vld [vmem:[%s798 + $0xd8] sm:$0xff]
      %v827 = vld [vmem:[%s798 + $0xe0] sm:$0xff]
      %v828 = vld [vmem:[%s798 + $0xe8] sm:$0xff]
      %v829 = vld [vmem:[%s798 + $0xf0] sm:$0xff]
      %v830 = vld [vmem:[%s798 + $0xf8] sm:$0xff]
      %v831 = vld [vmem:[#allocation2] sm:$0xff]
      %v832 = vld [vmem:[#allocation2 + $0x8] sm:$0xff]
      %v833 = vld [vmem:[#allocation2 + $0x10] sm:$0xff]
      %v834 = vld [vmem:[#allocation2 + $0x18] sm:$0xff]
      %v835 = vld [vmem:[#allocation2 + $0x20] sm:$0xff]
      %v836 = vld [vmem:[#allocation2 + $0x28] sm:$0xff]
      %v837 = vld [vmem:[#allocation2 + $0x30] sm:$0xff]
      %v838 = vld [vmem:[#allocation2 + $0x38] sm:$0xff]
      %v839 = vld [vmem:[#allocation2 + $0x40] sm:$0xff]
      %v840 = vld [vmem:[#allocation2 + $0x48] sm:$0xff]
      %v841 = vld [vmem:[#allocation2 + $0x50] sm:$0xff]
      %v842 = vld [vmem:[#allocation2 + $0x58] sm:$0xff]
      %v843 = vld [vmem:[#allocation2 + $0x60] sm:$0xff]
      %v844 = vld [vmem:[#allocation2 + $0x68] sm:$0xff]
      %v845 = vld [vmem:[#allocation2 + $0x70] sm:$0xff]
      %v846 = vld [vmem:[#allocation2 + $0x78] sm:$0xff]
      %v847 = vld [vmem:[#allocation2 + $0x80] sm:$0xff]
      %v848 = vld [vmem:[#allocation2 + $0x88] sm:$0xff]
      %v849 = vld [vmem:[#allocation2 + $0x90] sm:$0xff]
      %v850 = vld [vmem:[#allocation2 + $0x98] sm:$0xff]
      %v851 = vld [vmem:[#allocation2 + $0xa0] sm:$0xff]
      %v852 = vld [vmem:[#allocation2 + $0xa8] sm:$0xff]
      %v853 = vld [vmem:[#allocation2 + $0xb0] sm:$0xff]
      %v854 = vld [vmem:[#allocation2 + $0xb8] sm:$0xff]
      %v855 = vld [vmem:[#allocation2 + $0xc0] sm:$0xff]
      %v856 = vld [vmem:[#allocation2 + $0xc8] sm:$0xff]
      %v857 = vld [vmem:[#allocation2 + $0xd0] sm:$0xff]
      %v858 = vld [vmem:[#allocation2 + $0xd8] sm:$0xff]
      %v859 = vld [vmem:[#allocation2 + $0xe0] sm:$0xff]
      %v860 = vld [vmem:[#allocation2 + $0xe8] sm:$0xff]
      %v861 = vld [vmem:[#allocation2 + $0xf0] sm:$0xff]
      %v862 = vld [vmem:[#allocation2 + $0xf8] sm:$0xff]
      %864 = vset.pattern.permute.xlu0 0
      %865 = vperm.xlu0 %864, %v799
      %v866 = vpop.permute.xlu0 %865
      %869 = vset.pattern.permute.xlu0 0
      %870 = vperm.xlu0 %869, %v800
      %v871 = vpop.permute.xlu0 %870
      %874 = vset.pattern.permute.xlu0 0
      %875 = vperm.xlu0 %874, %v801
      %v876 = vpop.permute.xlu0 %875
      %879 = vset.pattern.permute.xlu0 0
      %880 = vperm.xlu0 %879, %v802
      %v881 = vpop.permute.xlu0 %880
      %884 = vset.pattern.permute.xlu0 0
      %885 = vperm.xlu0 %884, %v803
      %v886 = vpop.permute.xlu0 %885
      %889 = vset.pattern.permute.xlu0 0
      %890 = vperm.xlu0 %889, %v804
      %v891 = vpop.permute.xlu0 %890
      %894 = vset.pattern.permute.xlu0 0
      %895 = vperm.xlu0 %894, %v805
      %v896 = vpop.permute.xlu0 %895
      %899 = vset.pattern.permute.xlu0 0
      %900 = vperm.xlu0 %899, %v806
      %v901 = vpop.permute.xlu0 %900
      %904 = vset.pattern.permute.xlu0 0
      %905 = vperm.xlu0 %904, %v807
      %v906 = vpop.permute.xlu0 %905
      %909 = vset.pattern.permute.xlu0 0
      %910 = vperm.xlu0 %909, %v808
      %v911 = vpop.permute.xlu0 %910
      %914 = vset.pattern.permute.xlu0 0
      %915 = vperm.xlu0 %914, %v809
      %v916 = vpop.permute.xlu0 %915
      %919 = vset.pattern.permute.xlu0 0
      %920 = vperm.xlu0 %919, %v810
      %v921 = vpop.permute.xlu0 %920
      %924 = vset.pattern.permute.xlu0 0
      %925 = vperm.xlu0 %924, %v811
      %v926 = vpop.permute.xlu0 %925
      %929 = vset.pattern.permute.xlu0 0
      %930 = vperm.xlu0 %929, %v812
      %v931 = vpop.permute.xlu0 %930
      %934 = vset.pattern.permute.xlu0 0
      %935 = vperm.xlu0 %934, %v813
      %v936 = vpop.permute.xlu0 %935
      %939 = vset.pattern.permute.xlu0 0
      %940 = vperm.xlu0 %939, %v814
      %v941 = vpop.permute.xlu0 %940
      %944 = vset.pattern.permute.xlu0 0
      %945 = vperm.xlu0 %944, %v815
      %v946 = vpop.permute.xlu0 %945
      %949 = vset.pattern.permute.xlu0 0
      %950 = vperm.xlu0 %949, %v816
      %v951 = vpop.permute.xlu0 %950
      %954 = vset.pattern.permute.xlu0 0
      %955 = vperm.xlu0 %954, %v817
      %v956 = vpop.permute.xlu0 %955
      %959 = vset.pattern.permute.xlu0 0
      %960 = vperm.xlu0 %959, %v818
      %v961 = vpop.permute.xlu0 %960
      %964 = vset.pattern.permute.xlu0 0
      %965 = vperm.xlu0 %964, %v819
      %v966 = vpop.permute.xlu0 %965
      %969 = vset.pattern.permute.xlu0 0
      %970 = vperm.xlu0 %969, %v820
      %v971 = vpop.permute.xlu0 %970
      %974 = vset.pattern.permute.xlu0 0
      %975 = vperm.xlu0 %974, %v821
      %v976 = vpop.permute.xlu0 %975
      %979 = vset.pattern.permute.xlu0 0
      %980 = vperm.xlu0 %979, %v822
      %v981 = vpop.permute.xlu0 %980
      %984 = vset.pattern.permute.xlu0 0
      %985 = vperm.xlu0 %984, %v823
      %v986 = vpop.permute.xlu0 %985
      %989 = vset.pattern.permute.xlu0 0
      %990 = vperm.xlu0 %989, %v824
      %v991 = vpop.permute.xlu0 %990
      %994 = vset.pattern.permute.xlu0 0
      %995 = vperm.xlu0 %994, %v825
      %v996 = vpop.permute.xlu0 %995
      %999 = vset.pattern.permute.xlu0 0
      %1000 = vperm.xlu0 %999, %v826
      %v1001 = vpop.permute.xlu0 %1000
      %1004 = vset.pattern.permute.xlu0 0
      %1005 = vperm.xlu0 %1004, %v827
      %v1006 = vpop.permute.xlu0 %1005
      %1009 = vset.pattern.permute.xlu0 0
      %1010 = vperm.xlu0 %1009, %v828
      %v1011 = vpop.permute.xlu0 %1010
      %1014 = vset.pattern.permute.xlu0 0
      %1015 = vperm.xlu0 %1014, %v829
      %v1016 = vpop.permute.xlu0 %1015
      %1019 = vset.pattern.permute.xlu0 0
      %1020 = vperm.xlu0 %1019, %v830
      %v1021 = vpop.permute.xlu0 %1020
      %v1023 = vmul.f32 %v831, %v866
      %v1024 = vmul.f32 %v832, %v871
      %v1025 = vmul.f32 %v833, %v876
      %v1026 = vmul.f32 %v834, %v881
      %v1027 = vmul.f32 %v835, %v886
      %v1028 = vmul.f32 %v836, %v891
      %v1029 = vmul.f32 %v837, %v896
      %v1030 = vmul.f32 %v838, %v901
      %v1031 = vmul.f32 %v839, %v906
      %v1032 = vmul.f32 %v840, %v911
      %v1033 = vmul.f32 %v841, %v916
      %v1034 = vmul.f32 %v842, %v921
      %v1035 = vmul.f32 %v843, %v926
      %v1036 = vmul.f32 %v844, %v931
      %v1037 = vmul.f32 %v845, %v936
      %v1038 = vmul.f32 %v846, %v941
      %v1039 = vmul.f32 %v847, %v946
      %v1040 = vmul.f32 %v848, %v951
      %v1041 = vmul.f32 %v849, %v956
      %v1042 = vmul.f32 %v850, %v961
      %v1043 = vmul.f32 %v851, %v966
      %v1044 = vmul.f32 %v852, %v971
      %v1045 = vmul.f32 %v853, %v976
      %v1046 = vmul.f32 %v854, %v981
      %v1047 = vmul.f32 %v855, %v986
      %v1048 = vmul.f32 %v856, %v991
      %v1049 = vmul.f32 %v857, %v996
      %v1050 = vmul.f32 %v858, %v1001
      %v1051 = vmul.f32 %v859, %v1006
      %v1052 = vmul.f32 %v860, %v1011
      %v1053 = vmul.f32 %v861, %v1016
      %v1054 = vmul.f32 %v862, %v1021
      %1055 = vst [vmem:[#allocation2] sm:$0xff] %v1023
      %1056 = vst [vmem:[#allocation2 + $0x8] sm:$0xff] %v1024
      %1057 = vst [vmem:[#allocation2 + $0x10] sm:$0xff] %v1025
      %1058 = vst [vmem:[#allocation2 + $0x18] sm:$0xff] %v1026
      %1059 = vst [vmem:[#allocation2 + $0x20] sm:$0xff] %v1027
      %1060 = vst [vmem:[#allocation2 + $0x28] sm:$0xff] %v1028
      %1061 = vst [vmem:[#allocation2 + $0x30] sm:$0xff] %v1029
      %1062 = vst [vmem:[#allocation2 + $0x38] sm:$0xff] %v1030
      %1063 = vst [vmem:[#allocation2 + $0x40] sm:$0xff] %v1031
      %1064 = vst [vmem:[#allocation2 + $0x48] sm:$0xff] %v1032
      %1065 = vst [vmem:[#allocation2 + $0x50] sm:$0xff] %v1033
      %1066 = vst [vmem:[#allocation2 + $0x58] sm:$0xff] %v1034
      %1067 = vst [vmem:[#allocation2 + $0x60] sm:$0xff] %v1035
      %1068 = vst [vmem:[#allocation2 + $0x68] sm:$0xff] %v1036
      %1069 = vst [vmem:[#allocation2 + $0x70] sm:$0xff] %v1037
      %1070 = vst [vmem:[#allocation2 + $0x78] sm:$0xff] %v1038
      %1071 = vst [vmem:[#allocation2 + $0x80] sm:$0xff] %v1039
      %1072 = vst [vmem:[#allocation2 + $0x88] sm:$0xff] %v1040
      %1073 = vst [vmem:[#allocation2 + $0x90] sm:$0xff] %v1041
      %1074 = vst [vmem:[#allocation2 + $0x98] sm:$0xff] %v1042
      %1075 = vst [vmem:[#allocation2 + $0xa0] sm:$0xff] %v1043
      %1076 = vst [vmem:[#allocation2 + $0xa8] sm:$0xff] %v1044
      %1077 = vst [vmem:[#allocation2 + $0xb0] sm:$0xff] %v1045
      %1078 = vst [vmem:[#allocation2 + $0xb8] sm:$0xff] %v1046
      %1079 = vst [vmem:[#allocation2 + $0xc0] sm:$0xff] %v1047
      %1080 = vst [vmem:[#allocation2 + $0xc8] sm:$0xff] %v1048
      %1081 = vst [vmem:[#allocation2 + $0xd0] sm:$0xff] %v1049
      %1082 = vst [vmem:[#allocation2 + $0xd8] sm:$0xff] %v1050
      %1083 = vst [vmem:[#allocation2 + $0xe0] sm:$0xff] %v1051
      %1084 = vst [vmem:[#allocation2 + $0xe8] sm:$0xff] %v1052
      %1085 = vst [vmem:[#allocation2 + $0xf0] sm:$0xff] %v1053
      %1086 = vst [vmem:[#allocation2 + $0xf8] sm:$0xff] %v1054
    $region25: #{graph_convolution.1} parent=1 // pred_fallthru
      _
    // Predicated region
    $region26: #{graph_convolution.1} parent=1 // pred_check
      _
    $region27: #{graph_convolution.1} parent=1 // pred_check_branch
      %1088 = sbr.rel (0) target = $region29
    $region28: #{graph_convolution.1} parent=1 // pred_region
      %1090 = vsyncadd [#allocation3], 0
      %s1091 = sshll.u32 [#allocation2], 4
      %s1092 = int_to_ptr.vmem [resolvable:$true] %s1091
      %s1093 = sshll.u32 %s4, 4
      %s1094 = int_to_ptr.hbm [resolvable:$true] %s1093
      %1099 = dma.vmem_to_hbm [thread:$0]  %s1092, 4096, %s1094, [#allocation3], 128, 128, 8
    $region29: #{graph_convolution.1} parent=1 // pred_fallthru
      _
    // Predicated region
    $region30: #{graph_convolution.1} parent=1 // pred_check
      _
    $region31: #{graph_convolution.1} parent=1 // pred_check_branch
      %1101 = sbr.rel (0) target = $region33
    $region32: #{graph_convolution.1} parent=1 // pred_region
      %1103 = dma.done [#allocation3], 4096
    $region33: #{graph_convolution.1} parent=1 // pred_fallthru
      _
    %1104 = vsyncpa [#allocation3], 1

</llo_original>
